<compile_context>
chip_gen: v5e
topology: v5e:2x2
jax: 0.10.0
libtpu: 0.0.40
codegen_flags: <defaults>
</compile_context>

<pallas_src>
import jax
import jax.numpy as jnp
from jax.experimental import pallas as pl
from jax.experimental.pallas import tpu as pltpu


def _embed_kernel(x_ref, e_ref, w_ref, b_ref, o_ref):
    # x_ref: (TB, TN)      batch x mask tile of inputs
    # e_ref: (TN, TN*D)    0/1 diagonal replication block (VMEM resident)
    # w_ref: (1, TN*D)     flattened weights tile
    # b_ref: (1, TN*D)     flattened biases tile
    # o_ref: (TB, TN*D)    lane-dense output tile
    x_rep = jnp.dot(
        x_ref[...],
        e_ref[...],
        preferred_element_type=jnp.float32,
        precision=jax.lax.Precision.HIGHEST,  # exact f32 replication on the MXU
    )
    o_ref[...] = (x_rep * w_ref[...] + b_ref[...]).astype(o_ref.dtype)


def _tpu_vmem_capacity_bytes():
    """Best-effort physical VMEM query; conservative (v7x) default on failure."""
    try:
        info = pltpu.get_tpu_info()
        cap = getattr(info, "vmem_capacity_bytes", None)
        if cap:
            return int(cap)
    except Exception:
        pass
    return 64 * 1024 * 1024


def _cdiv(a, b):
    return -(-a // b)


def rtids_embedder(x, weights, biases, *,
                   target_block_bytes=None,
                   min_pallas_bytes=256 * 1024):
    """x: (B, N); weights/biases: (N, D)  ->  (B, N, D)."""
    B, N = x.shape
    N_w, D = weights.shape
    assert N == N_w, "feature count must equal mask"
    NE = N * D

    out_dtype = jnp.result_type(x.dtype, weights.dtype, biases.dtype)
    itemsize = jnp.dtype(out_dtype).itemsize
    x_item = jnp.dtype(x.dtype).itemsize
    w_item = jnp.dtype(weights.dtype).itemsize
    out_bytes = B * NE * itemsize

    # ---- small-problem fallback: XLA fusion beats fixed pallas_call overhead.
    if out_bytes < min_pallas_bytes:
        return (x[:, :, None] * weights[None] + biases[None]).astype(out_dtype)

    # ---- generation-aware budgets (v7x: 64 MiB VMEM; v5e/v6e: 128 MiB).
    phys_vmem = _tpu_vmem_capacity_bytes()
    if phys_vmem >= 128 * 1024 * 1024:          # v5e / v6e
        vmem_limit = 64 * 1024 * 1024
        if target_block_bytes is None:
            target_block_bytes = 4 * 1024 * 1024
    else:                                        # v7x or unknown -> conservative
        vmem_limit = 48 * 1024 * 1024
        if target_block_bytes is None:
            target_block_bytes = 2 * 1024 * 1024

    # ---- mask (N) tiling: block-diagonal replication matrix.
    e_budget = min(vmem_limit // 4, 8 * 1024 * 1024)
    tn = N
    if N * N * D * 4 > e_budget:
        # Want a divisor of N that is a multiple of 128 (keeps every block dim
        # (8,128)-aligned) whose diagonal E block fits the budget.
        tn = 0
        cand = (N // 128) * 128
        while cand >= 128:
            if N % cand == 0 and cand * cand * D * 4 <= e_budget:
                tn = cand
                break
            cand -= 128
        if tn == 0:
            # TODO(synk): no (8,128)-aligned divisor of N fits the E budget;
            # fall back to tn=N (large resident E) rather than misaligned tiles.
            tn = N
    ne_blk = tn * D
    num_j = N // tn  # tn == N or tn divides N

    # ---- batch tiling.  Sublane alignment is dtype dependent (8/16/32 rows).
    sub_align = max(8, 32 // itemsize)
    rows_per_block = max(int(target_block_bytes) // (ne_blk * itemsize), 1)
    if rows_per_block >= B:
        tb = B
    else:
        tb = max(sub_align, (rows_per_block // sub_align) * sub_align)

    # Guarantee >=2 grid blocks for large problems so both v7x TensorCores work
    # (no-op on v5e/v6e which have a single TC).
    if num_j * _cdiv(B, tb) < 2 and out_bytes >= (1 << 20):
        half_rows = _cdiv(B, 2)
        tb_split = min(B, max(sub_align, _cdiv(half_rows, sub_align) * sub_align))
        if tb_split < B:
            tb = tb_split

    # Explicit VMEM budget check (double-buffered out/x/E + w + b), downshift tb.
    def _vmem_need(tb_):
        return (2 * tb_ * ne_blk * itemsize      # output blocks
                + 2 * tb_ * tn * x_item          # x blocks
                + 2 * tn * ne_blk * 4            # E (worst case double-buffered)
                + 2 * 2 * ne_blk * w_item)       # weights + biases blocks
    while tb > sub_align and _vmem_need(tb) > int(0.85 * vmem_limit):
        tb = max(sub_align, ((tb // 2) // sub_align) * sub_align)

    grid = (_cdiv(B, tb), num_j)

    # Lane-dense flattening of the (N, D) parameter plane and the diagonal E
    # block: (x_blk @ e_blk)[b, n*D + d] == x_blk[b, n].
    w_flat = weights.reshape(1, NE)
    b_flat = biases.reshape(1, NE)
    e_blk = jnp.repeat(jnp.eye(tn, dtype=jnp.float32), D, axis=1)

    # Advisory cost.  f32 x f32 at HIGHEST lowers to ~6 bf16 MXU passes, so the
    # matmul flop term is scaled accordingly.
    mxu_passes = 6
    flops = mxu_passes * 2 * B * NE * tn + 2 * B * NE
    bytes_accessed = (x_item * B * N + 4 * tn * ne_blk
                      + 2 * w_item * NE + itemsize * B * NE)

    wb_resident = (num_j == 1)  # w/b have constant index maps only if 1 NE block

    def _run(use_buffered):
        def _spec(shape, index_map, resident):
            if use_buffered and resident:
                # Single-buffer operands that are never re-fetched.
                return pl.BlockSpec(shape, index_map,
                                    pipeline_mode=pl.Buffered(1))
            return pl.BlockSpec(shape, index_map)

        return pl.pallas_call(
            _embed_kernel,
            out_shape=jax.ShapeDtypeStruct((B, NE), out_dtype),
            grid_spec=pltpu.PrefetchScalarGridSpec(
                num_scalar_prefetch=0,
                grid=grid,
                in_specs=[
                    _spec((tb, tn), lambda i, j: (i, j), False),       # x tile
                    _spec((tn, ne_blk), lambda i, j: (0, 0), True),    # E (resident)
                    _spec((1, ne_blk), lambda i, j: (0, j), wb_resident),  # weights
                    _spec((1, ne_blk), lambda i, j: (0, j), wb_resident),  # biases
                ],
                out_specs=pl.BlockSpec((tb, ne_blk), lambda i, j: (i, j)),
            ),
            compiler_params=pltpu.CompilerParams(
                dimension_semantics=("parallel", "parallel"),  # megacore-shardable
                vmem_limit_bytes=vmem_limit,
            ),
            cost_estimate=pl.CostEstimate(
                flops=flops, transcendentals=0, bytes_accessed=bytes_accessed),
        )(x, e_blk, w_flat, b_flat)

    use_buffered = hasattr(pl, "Buffered")
    try:
        out_flat = _run(use_buffered)
        if use_buffered:
            # Force any deferred compile/runtime error to surface here so the
            # default-buffering fallback below can catch it.
            out_flat = jax.block_until_ready(out_flat)
    except Exception:
        if not use_buffered:
            raise
        out_flat = _run(False)

    # Free reshape back to the module's (B, N, D) output layout.
    return out_flat.reshape(B, N, D)


if __name__ == "__main__":
    # Small shapes consistent with the module: dim=32 (hidden), mask=8, batch=2.
    B, N, D = 2, 8, 32

    key = jax.random.PRNGKey(0)
    k_x, k_w, k_b = jax.random.split(key, 3)

    x = jax.random.normal(k_x, (B, N), dtype=jnp.float32)
    weights = jax.random.normal(k_w, (N, D), dtype=jnp.float32)   # torch.randn(mask, dim)
    biases = jax.random.normal(k_b, (N, D), dtype=jnp.float32)    # torch.randn(mask, dim)

    # Reference (plain JAX, same semantics as the PyTorch forward).
    ref = x[:, :, None] * weights[None] + biases[None]

    # 1) Pallas kernel path (forced: demo shapes are below the small-problem
    #    threshold, but we still want the kernel itself exercised on TPU).
    out_kernel = rtids_embedder(x, weights, biases, min_pallas_bytes=0)
    out_kernel = jax.block_until_ready(out_kernel)
    assert out_kernel.shape == (B, N, D)
    assert jnp.allclose(out_kernel, ref, atol=1e-5, rtol=1e-5)

    # 2) Default path (small-problem fallback) must match as well.
    out_default = jax.block_until_ready(rtids_embedder(x, weights, biases))
    assert out_default.shape == (B, N, D)
    assert jnp.allclose(out_default, ref, atol=1e-5, rtol=1e-5)

    print("KERNEL_OK")
</pallas_src>

<mosaic_0001>
module attributes {stable_mosaic.version = 11 : i64} {
  func.func @_embed_kernel(%arg0: i32, %arg1: i32, %arg2: memref<2x8xf32, #tpu.memory_space<vmem>>, %arg3: memref<8x256xf32, #tpu.memory_space<vmem>>, %arg4: memref<1x256xf32, #tpu.memory_space<vmem>>, %arg5: memref<1x256xf32, #tpu.memory_space<vmem>>, %arg6: memref<2x256xf32, #tpu.memory_space<vmem>>) attributes {dimension_semantics = [#tpu.dimension_semantics<parallel>, #tpu.dimension_semantics<parallel>], iteration_bounds = array<i64: 1, 1>, scalar_prefetch = 0 : i64, scratch_operands = 0 : i64, tpu.core_type = #tpu.core_type<tc>, window_params = [{transform_indices = @transform_0, window_bounds = array<i64: 2, 8>}, {pipeline_mode = #tpu.pipeline_mode<synchronous>, transform_indices = @transform_1, window_bounds = array<i64: 8, 256>}, {pipeline_mode = #tpu.pipeline_mode<synchronous>, transform_indices = @transform_2, window_bounds = array<i64: 1, 256>}, {pipeline_mode = #tpu.pipeline_mode<synchronous>, transform_indices = @transform_3, window_bounds = array<i64: 1, 256>}, {transform_indices = @transform_4, window_bounds = array<i64: 2, 256>}]} {
    %c0 = arith.constant 0 : index
    %c0_0 = arith.constant 0 : index
    %0 = vector.load %arg2[%c0, %c0_0] : memref<2x8xf32, #tpu.memory_space<vmem>>, vector<2x8xf32>
    %c0_1 = arith.constant 0 : index
    %c0_2 = arith.constant 0 : index
    %1 = vector.load %arg3[%c0_1, %c0_2] : memref<8x256xf32, #tpu.memory_space<vmem>>, vector<8x256xf32>
    %cst = arith.constant dense<0.000000e+00> : vector<2x256xf32>
    %2 = tpu.matmul %0, %1, %cst {dimension_numbers = #tpu.dot_dimension_numbers<[1], [0], [0], [1], [0, 0, 1, 1], [], []>, precision = #tpu.contract_precision<fp32>} : vector<2x8xf32>, vector<8x256xf32>, vector<2x256xf32> -> vector<2x256xf32>
    %c0_3 = arith.constant 0 : index
    %c0_4 = arith.constant 0 : index
    %3 = vector.load %arg4[%c0_3, %c0_4] : memref<1x256xf32, #tpu.memory_space<vmem>>, vector<1x256xf32>
    %4 = vector.broadcast %3 : vector<1x256xf32> to vector<2x256xf32>
    %5 = arith.mulf %2, %4 : vector<2x256xf32>
    %c0_5 = arith.constant 0 : index
    %c0_6 = arith.constant 0 : index
    %6 = vector.load %arg5[%c0_5, %c0_6] : memref<1x256xf32, #tpu.memory_space<vmem>>, vector<1x256xf32>
    %7 = vector.broadcast %6 : vector<1x256xf32> to vector<2x256xf32>
    %8 = arith.addf %5, %7 : vector<2x256xf32>
    %c0_7 = arith.constant 0 : index
    %c0_8 = arith.constant 0 : index
    %9 = vector.load %arg6[%c0_7, %c0_8] : memref<2x256xf32, #tpu.memory_space<vmem>>, vector<2x256xf32>
    tpu.vector_store %arg6[%c0_7, %c0_8], %8 {strides = array<i32>} : memref<2x256xf32, #tpu.memory_space<vmem>>, vector<2x256xf32>,
    return
  }
  func.func @transform_0(%arg0: i32, %arg1: i32) -> (i32, i32) {
    %c0_i32 = arith.constant 0 : i32
    return %arg0, %arg1 : i32, i32
  }
  func.func @transform_1(%arg0: i32, %arg1: i32) -> (i32, i32) {
    %c0_i32 = arith.constant 0 : i32
    %c0_i32_0 = arith.constant 0 : i32
    %c0_i32_1 = arith.constant 0 : i32
    return %c0_i32, %c0_i32_0 : i32, i32
  }
  func.func @transform_2(%arg0: i32, %arg1: i32) -> (i32, i32) {
    %c0_i32 = arith.constant 0 : i32
    %c0_i32_0 = arith.constant 0 : i32
    return %c0_i32, %arg1 : i32, i32
  }
  func.func @transform_3(%arg0: i32, %arg1: i32) -> (i32, i32) {
    %c0_i32 = arith.constant 0 : i32
    %c0_i32_0 = arith.constant 0 : i32
    return %c0_i32, %arg1 : i32, i32
  }
  func.func @transform_4(%arg0: i32, %arg1: i32) -> (i32, i32) {
    %c0_i32 = arith.constant 0 : i32
    return %arg0, %arg1 : i32, i32
  }
}

module attributes {stable_mosaic.version = 11 : i64} {
  func.func @_embed_kernel(%arg0: i32, %arg1: i32, %arg2: memref<2x8xf32, #tpu.memory_space<vmem>>, %arg3: memref<8x256xf32, #tpu.memory_space<vmem>>, %arg4: memref<1x256xf32, #tpu.memory_space<vmem>>, %arg5: memref<1x256xf32, #tpu.memory_space<vmem>>, %arg6: memref<2x256xf32, #tpu.memory_space<vmem>>) attributes {dimension_semantics = [#tpu.dimension_semantics<parallel>, #tpu.dimension_semantics<parallel>], iteration_bounds = array<i64: 1, 1>, scalar_prefetch = 0 : i64, scratch_operands = 0 : i64, tpu.core_type = #tpu.core_type<tc>, window_params = [{transform_indices = @transform_0, window_bounds = array<i64: 2, 8>}, {pipeline_mode = #tpu.pipeline_mode<synchronous>, transform_indices = @transform_1, window_bounds = array<i64: 8, 256>}, {transform_indices = @transform_2, window_bounds = array<i64: 1, 256>}, {transform_indices = @transform_3, window_bounds = array<i64: 1, 256>}, {transform_indices = @transform_4, window_bounds = array<i64: 2, 256>}]} {
    %c0 = arith.constant 0 : index
    %c0_0 = arith.constant 0 : index
    %0 = vector.load %arg2[%c0, %c0_0] : memref<2x8xf32, #tpu.memory_space<vmem>>, vector<2x8xf32>
    %c0_1 = arith.constant 0 : index
    %c0_2 = arith.constant 0 : index
    %1 = vector.load %arg3[%c0_1, %c0_2] : memref<8x256xf32, #tpu.memory_space<vmem>>, vector<8x256xf32>
    %cst = arith.constant dense<0.000000e+00> : vector<2x256xf32>
    %2 = tpu.matmul %0, %1, %cst {dimension_numbers = #tpu.dot_dimension_numbers<[1], [0], [0], [1], [0, 0, 1, 1], [], []>, precision = #tpu.contract_precision<fp32>} : vector<2x8xf32>, vector<8x256xf32>, vector<2x256xf32> -> vector<2x256xf32>
    %c0_3 = arith.constant 0 : index
    %c0_4 = arith.constant 0 : index
    %3 = vector.load %arg4[%c0_3, %c0_4] : memref<1x256xf32, #tpu.memory_space<vmem>>, vector<1x256xf32>
    %4 = vector.broadcast %3 : vector<1x256xf32> to vector<2x256xf32>
    %5 = arith.mulf %2, %4 : vector<2x256xf32>
    %c0_5 = arith.constant 0 : index
    %c0_6 = arith.constant 0 : index
    %6 = vector.load %arg5[%c0_5, %c0_6] : memref<1x256xf32, #tpu.memory_space<vmem>>, vector<1x256xf32>
    %7 = vector.broadcast %6 : vector<1x256xf32> to vector<2x256xf32>
    %8 = arith.addf %5, %7 : vector<2x256xf32>
    %c0_7 = arith.constant 0 : index
    %c0_8 = arith.constant 0 : index
    %9 = vector.load %arg6[%c0_7, %c0_8] : memref<2x256xf32, #tpu.memory_space<vmem>>, vector<2x256xf32>
    tpu.vector_store %arg6[%c0_7, %c0_8], %8 {strides = array<i32>} : memref<2x256xf32, #tpu.memory_space<vmem>>, vector<2x256xf32>,
    return
  }
  func.func @transform_0(%arg0: i32, %arg1: i32) -> (i32, i32) {
    %c0_i32 = arith.constant 0 : i32
    return %arg0, %arg1 : i32, i32
  }
  func.func @transform_1(%arg0: i32, %arg1: i32) -> (i32, i32) {
    %c0_i32 = arith.constant 0 : i32
    %c0_i32_0 = arith.constant 0 : i32
    %c0_i32_1 = arith.constant 0 : i32
    return %c0_i32, %c0_i32_0 : i32, i32
  }
  func.func @transform_2(%arg0: i32, %arg1: i32) -> (i32, i32) {
    %c0_i32 = arith.constant 0 : i32
    %c0_i32_0 = arith.constant 0 : i32
    return %c0_i32, %arg1 : i32, i32
  }
  func.func @transform_3(%arg0: i32, %arg1: i32) -> (i32, i32) {
    %c0_i32 = arith.constant 0 : i32
    %c0_i32_0 = arith.constant 0 : i32
    return %c0_i32, %arg1 : i32, i32
  }
  func.func @transform_4(%arg0: i32, %arg1: i32) -> (i32, i32) {
    %c0_i32 = arith.constant 0 : i32
    return %arg0, %arg1 : i32, i32
  }
}

</mosaic_0001>

<llo_original>
// kernel: tpu_custom_call.1
$region0: #{tpu_custom_call.1}
  #allocation0 [shape = 'u32[]', space=smem, size = 0x4, offset = 0x4, fixed_abs, tag = 'smem constant byte address 0x4 - core index']
  #allocation1 [shape = 'u32[72,128]{1,0:T(1,128)}', space=vmem, size = 0x9000, scoped, tag = 'internal scratch']
  %s0 = inlined_call_operand.hbm [shape: f32[2,8], index: 0, kind: input, shape index: {}]
  %s1 = inlined_call_operand.hbm [shape: f32[8,256], index: 1, kind: input, shape index: {}]
  %s2 = inlined_call_operand.hbm [shape: f32[1,256], index: 2, kind: input, shape index: {}]
  %s3 = inlined_call_operand.vmem [shape: f32[1,256], index: 3, kind: input, shape index: {}]
  %s4 = inlined_call_operand.hbm [shape: f32[2,256], index: 4, kind: output, shape index: {}]
  %s5 = sld [smem:[#allocation0]]
  $region38: #{tpu_custom_call.1} parent=0
    _
  %s7 = ssub.s32 1, %s5
  %s8 = scalar_select 0, %s7, %s5
  $region1: #{tpu_custom_call.1} parent=0
    #allocation2 [shape = 'u8[1024]{0}', space=vmem, size = 0x400, scoped, tag = 'input window, operand 0, single buffered']
    #allocation3 [shape = 's32[1]{0}', space=sflag, size = 0x4, scoped, tag = 'scoped memory for tpu_custom_call.1']
    #allocation4 [shape = 's32[1]{0}', space=sflag, size = 0x4, scoped, tag = 'scoped memory for tpu_custom_call.1']
    #allocation5 [shape = 'u8[8192]{0}', space=vmem, size = 0x2000, scoped, tag = 'input window, operand 1, single buffered']
    #allocation6 [shape = 's32[1]{0}', space=sflag, size = 0x4, scoped, tag = 'scoped memory for tpu_custom_call.1']
    #allocation7 [shape = 'u8[1024]{0}', space=vmem, size = 0x400, scoped, tag = 'input window, operand 2, single buffered']
    #allocation8 [shape = 'u8[2048]{0}', space=vmem, size = 0x800, scoped, tag = 'output window, operand 0, single buffered']
    %9 = vsyncpa [#allocation3], 0
    %10 = vsyncpa [#allocation6], 0
    %11 = vsyncpa [#allocation4], 0
    // Predicated region
    $region2: #{tpu_custom_call.1} parent=1 // pred_check
      _
    $region3: #{tpu_custom_call.1} parent=1 // pred_check_branch
      %13 = sbr.rel (0) target = $region5
    $region4: #{tpu_custom_call.1} parent=1 // pred_region
      %15 = vsyncadd [#allocation3], 0
      %s17 = sshll.u32 %s0, 4
      %s18 = int_to_ptr.hbm [resolvable:$true] %s17
      %s19 = sshll.u32 [#allocation2], 4
      %s20 = int_to_ptr.vmem [resolvable:$true] %s19
      %22 = dma.hbm_to_vmem [thread:$0]  %s18, 32, %s20, [#allocation3]
    $region5: #{tpu_custom_call.1} parent=1 // pred_fallthru
      _
    // Predicated region
    $region6: #{tpu_custom_call.1} parent=1 // pred_check
      _
    $region7: #{tpu_custom_call.1} parent=1 // pred_check_branch
      %24 = sbr.rel (0) target = $region9
    $region8: #{tpu_custom_call.1} parent=1 // pred_region
      %26 = vsyncadd [#allocation6], 0
      %s28 = sshll.u32 %s1, 4
      %s29 = int_to_ptr.hbm [resolvable:$true] %s28
      %s30 = sshll.u32 [#allocation5], 4
      %s31 = int_to_ptr.vmem [resolvable:$true] %s30
      %33 = dma.hbm_to_vmem [thread:$0]  %s29, 256, %s31, [#allocation6]
    $region9: #{tpu_custom_call.1} parent=1 // pred_fallthru
      _
    // Predicated region
    $region10: #{tpu_custom_call.1} parent=1 // pred_check
      _
    $region11: #{tpu_custom_call.1} parent=1 // pred_check_branch
      %35 = sbr.rel (0) target = $region13
    $region12: #{tpu_custom_call.1} parent=1 // pred_region
      %37 = vsyncadd [#allocation6], 0
      %s39 = sshll.u32 %s2, 4
      %s40 = int_to_ptr.hbm [resolvable:$true] %s39
      %s41 = sshll.u32 [#allocation7], 4
      %s42 = int_to_ptr.vmem [resolvable:$true] %s41
      %44 = dma.hbm_to_vmem [thread:$0]  %s40, 32, %s42, [#allocation6]
    $region13: #{tpu_custom_call.1} parent=1 // pred_fallthru
      _
    // Predicated region
    $region14: #{tpu_custom_call.1} parent=1 // pred_check
      _
    $region15: #{tpu_custom_call.1} parent=1 // pred_check_branch
      %46 = sbr.rel (0) target = $region17
    $region16: #{tpu_custom_call.1} parent=1 // pred_region
      _
    $region17: #{tpu_custom_call.1} parent=1 // pred_fallthru
      _
    // Predicated region
    $region18: #{tpu_custom_call.1} parent=1 // pred_check
      _
    $region19: #{tpu_custom_call.1} parent=1 // pred_check_branch
      %48 = sbr.rel (0) target = $region21
    $region20: #{tpu_custom_call.1} parent=1 // pred_region
      %50 = dma.done [#allocation3], 32
    $region21: #{tpu_custom_call.1} parent=1 // pred_fallthru
      _
    // Predicated region
    $region22: #{tpu_custom_call.1} parent=1 // pred_check
      _
    $region23: #{tpu_custom_call.1} parent=1 // pred_check_branch
      %52 = sbr.rel (0) target = $region25
    $region24: #{tpu_custom_call.1} parent=1 // pred_region
      %54 = dma.done [#allocation6], 256
    $region25: #{tpu_custom_call.1} parent=1 // pred_fallthru
      _
    // Predicated region
    $region26: #{tpu_custom_call.1} parent=1 // pred_check
      _
    $region27: #{tpu_custom_call.1} parent=1 // pred_check_branch
      %56 = sbr.rel (0) target = $region29
    $region28: #{tpu_custom_call.1} parent=1 // pred_region
      %58 = dma.done [#allocation6], 32
    $region29: #{tpu_custom_call.1} parent=1 // pred_fallthru
      _
    %v59 = vld [vmem:[#allocation2] sm:$0x3]
    %v60 = vld [vmem:[#allocation5] sm:$0xff]
    %v61 = vld [vmem:[#allocation5 + $0x8] sm:$0xff]
    %vm62 = vcmask 64512
    %v64 = vsel %vm62, %v59, 0
    %66 = vmatpush.msra.mxu0 0.0
    %67 = vmatpush.msra.mxu0 0.0
    %68 = vmatpush.msra.mxu0 0.0
    %69 = vmatpush.msra.mxu0 0.0
    %70 = vmatpush.msra.mxu0 0.0
    %71 = vmatpush.msra.mxu0 0.0
    %72 = vmatpush.msra.mxu0 0.0
    %73 = vmatpush.msra.mxu0 0.0
    %74 = vmatpush.msra.mxu0 0.0
    %75 = vmatpush.msra.mxu0 0.0
    %76 = vmatpush.msra.mxu0 0.0
    %77 = vmatpush.msra.mxu0 0.0
    %78 = vmatpush.msra.mxu0 0.0
    %79 = vmatpush.msra.mxu0 0.0
    %80 = vmatpush.msra.mxu0 0.0
    %v81 = vand.u32 %v60, 4294901760
    %82 = vmatpush.msra.mxu0 %v81
    %v83 = vand.u32 %v64, 4294901760
    %v84 = vsub.f32 %v64, %v83
    %v85 = vand.u32 %v84, 4294901760
    %v86 = vsub.f32 %v84, %v85
    %v87 = vand.u32 %v86, 4294901760
    %88 = vmatmul.f32.gmra.mxu0 %v87
    %v89 = vpop.f32.mrf.mxu0
    %v90 = vadd.f32 0.0, %v89
    %91 = vdwg.mxu0
    %92 = vmatpush.msra.mxu0 0.0
    %93 = vmatpush.msra.mxu0 0.0
    %94 = vmatpush.msra.mxu0 0.0
    %95 = vmatpush.msra.mxu0 0.0
    %96 = vmatpush.msra.mxu0 0.0
    %97 = vmatpush.msra.mxu0 0.0
    %98 = vmatpush.msra.mxu0 0.0
    %99 = vmatpush.msra.mxu0 0.0
    %100 = vmatpush.msra.mxu0 0.0
    %101 = vmatpush.msra.mxu0 0.0
    %102 = vmatpush.msra.mxu0 0.0
    %103 = vmatpush.msra.mxu0 0.0
    %104 = vmatpush.msra.mxu0 0.0
    %105 = vmatpush.msra.mxu0 0.0
    %106 = vmatpush.msra.mxu0 0.0
    %v107 = vand.u32 %v60, 4294901760
    %v108 = vsub.f32 %v60, %v107
    %v109 = vand.u32 %v108, 4294901760
    %v110 = vsub.f32 %v108, %v109
    %v111 = vand.u32 %v110, 4294901760
    %112 = vmatpush.msra.mxu0 %v111
    %v113 = vand.u32 %v64, 4294901760
    %114 = vmatmul.f32.gmra.mxu0 %v113
    %v115 = vpop.f32.mrf.mxu0
    %v116 = vadd.f32 %v90, %v115
    %117 = vdwg.mxu0
    %118 = vmatpush.msra.mxu0 0.0
    %119 = vmatpush.msra.mxu0 0.0
    %120 = vmatpush.msra.mxu0 0.0
    %121 = vmatpush.msra.mxu0 0.0
    %122 = vmatpush.msra.mxu0 0.0
    %123 = vmatpush.msra.mxu0 0.0
    %124 = vmatpush.msra.mxu0 0.0
    %125 = vmatpush.msra.mxu0 0.0
    %126 = vmatpush.msra.mxu0 0.0
    %127 = vmatpush.msra.mxu0 0.0
    %128 = vmatpush.msra.mxu0 0.0
    %129 = vmatpush.msra.mxu0 0.0
    %130 = vmatpush.msra.mxu0 0.0
    %131 = vmatpush.msra.mxu0 0.0
    %132 = vmatpush.msra.mxu0 0.0
    %v133 = vand.u32 %v60, 4294901760
    %v134 = vsub.f32 %v60, %v133
    %135 = vmatpush.msra.mxu0 %v134
    %v136 = vand.u32 %v64, 4294901760
    %v137 = vsub.f32 %v64, %v136
    %138 = vmatmul.f32.gmra.mxu0 %v137
    %v139 = vpop.f32.mrf.mxu0
    %v140 = vadd.f32 %v116, %v139
    %141 = vdwg.mxu0
    %142 = vmatpush.msra.mxu0 0.0
    %143 = vmatpush.msra.mxu0 0.0
    %144 = vmatpush.msra.mxu0 0.0
    %145 = vmatpush.msra.mxu0 0.0
    %146 = vmatpush.msra.mxu0 0.0
    %147 = vmatpush.msra.mxu0 0.0
    %148 = vmatpush.msra.mxu0 0.0
    %149 = vmatpush.msra.mxu0 0.0
    %150 = vmatpush.msra.mxu0 0.0
    %151 = vmatpush.msra.mxu0 0.0
    %152 = vmatpush.msra.mxu0 0.0
    %153 = vmatpush.msra.mxu0 0.0
    %154 = vmatpush.msra.mxu0 0.0
    %155 = vmatpush.msra.mxu0 0.0
    %156 = vmatpush.msra.mxu0 0.0
    %v157 = vand.u32 %v60, 4294901760
    %158 = vmatpush.msra.mxu0 %v157
    %v159 = vand.u32 %v64, 4294901760
    %v160 = vsub.f32 %v64, %v159
    %v161 = vand.u32 %v160, 4294901760
    %162 = vmatmul.f32.gmra.mxu0 %v161
    %v163 = vpop.f32.mrf.mxu0
    %v164 = vadd.f32 %v140, %v163
    %165 = vdwg.mxu0
    %166 = vmatpush.msra.mxu0 0.0
    %167 = vmatpush.msra.mxu0 0.0
    %168 = vmatpush.msra.mxu0 0.0
    %169 = vmatpush.msra.mxu0 0.0
    %170 = vmatpush.msra.mxu0 0.0
    %171 = vmatpush.msra.mxu0 0.0
    %172 = vmatpush.msra.mxu0 0.0
    %173 = vmatpush.msra.mxu0 0.0
    %174 = vmatpush.msra.mxu0 0.0
    %175 = vmatpush.msra.mxu0 0.0
    %176 = vmatpush.msra.mxu0 0.0
    %177 = vmatpush.msra.mxu0 0.0
    %178 = vmatpush.msra.mxu0 0.0
    %179 = vmatpush.msra.mxu0 0.0
    %180 = vmatpush.msra.mxu0 0.0
    %v181 = vand.u32 %v60, 4294901760
    %v182 = vsub.f32 %v60, %v181
    %v183 = vand.u32 %v182, 4294901760
    %184 = vmatpush.msra.mxu0 %v183
    %v185 = vand.u32 %v64, 4294901760
    %186 = vmatmul.f32.gmra.mxu0 %v185
    %v187 = vpop.f32.mrf.mxu0
    %v188 = vadd.f32 %v164, %v187
    %189 = vdwg.mxu0
    %190 = vmatpush.msra.mxu0 0.0
    %191 = vmatpush.msra.mxu0 0.0
    %192 = vmatpush.msra.mxu0 0.0
    %193 = vmatpush.msra.mxu0 0.0
    %194 = vmatpush.msra.mxu0 0.0
    %195 = vmatpush.msra.mxu0 0.0
    %196 = vmatpush.msra.mxu0 0.0
    %197 = vmatpush.msra.mxu0 0.0
    %198 = vmatpush.msra.mxu0 0.0
    %199 = vmatpush.msra.mxu0 0.0
    %200 = vmatpush.msra.mxu0 0.0
    %201 = vmatpush.msra.mxu0 0.0
    %202 = vmatpush.msra.mxu0 0.0
    %203 = vmatpush.msra.mxu0 0.0
    %204 = vmatpush.msra.mxu0 0.0
    %v205 = vand.u32 %v60, 4294901760
    %206 = vmatpush.msra.mxu0 %v205
    %v207 = vand.u32 %v64, 4294901760
    %208 = vmatmul.f32.gmra.mxu0 %v207
    %v209 = vpop.f32.mrf.mxu0
    %v210 = vadd.f32 %v188, %v209
    %211 = vdwg.mxu0
    %212 = vmatpush.msra.mxu0 0.0
    %213 = vmatpush.msra.mxu0 0.0
    %214 = vmatpush.msra.mxu0 0.0
    %215 = vmatpush.msra.mxu0 0.0
    %216 = vmatpush.msra.mxu0 0.0
    %217 = vmatpush.msra.mxu0 0.0
    %218 = vmatpush.msra.mxu0 0.0
    %219 = vmatpush.msra.mxu0 0.0
    %220 = vmatpush.msra.mxu0 0.0
    %221 = vmatpush.msra.mxu0 0.0
    %222 = vmatpush.msra.mxu0 0.0
    %223 = vmatpush.msra.mxu0 0.0
    %224 = vmatpush.msra.mxu0 0.0
    %225 = vmatpush.msra.mxu0 0.0
    %226 = vmatpush.msra.mxu0 0.0
    %v227 = vand.u32 %v61, 4294901760
    %228 = vmatpush.msra.mxu0 %v227
    %v229 = vand.u32 %v64, 4294901760
    %v230 = vsub.f32 %v64, %v229
    %v231 = vand.u32 %v230, 4294901760
    %v232 = vsub.f32 %v230, %v231
    %v233 = vand.u32 %v232, 4294901760
    %234 = vmatmul.f32.gmra.mxu0 %v233
    %v235 = vpop.f32.mrf.mxu0
    %v236 = vadd.f32 0.0, %v235
    %237 = vdwg.mxu0
    %238 = vmatpush.msra.mxu0 0.0
    %239 = vmatpush.msra.mxu0 0.0
    %240 = vmatpush.msra.mxu0 0.0
    %241 = vmatpush.msra.mxu0 0.0
    %242 = vmatpush.msra.mxu0 0.0
    %243 = vmatpush.msra.mxu0 0.0
    %244 = vmatpush.msra.mxu0 0.0
    %245 = vmatpush.msra.mxu0 0.0
    %246 = vmatpush.msra.mxu0 0.0
    %247 = vmatpush.msra.mxu0 0.0
    %248 = vmatpush.msra.mxu0 0.0
    %249 = vmatpush.msra.mxu0 0.0
    %250 = vmatpush.msra.mxu0 0.0
    %251 = vmatpush.msra.mxu0 0.0
    %252 = vmatpush.msra.mxu0 0.0
    %v253 = vand.u32 %v61, 4294901760
    %v254 = vsub.f32 %v61, %v253
    %v255 = vand.u32 %v254, 4294901760
    %v256 = vsub.f32 %v254, %v255
    %v257 = vand.u32 %v256, 4294901760
    %258 = vmatpush.msra.mxu0 %v257
    %v259 = vand.u32 %v64, 4294901760
    %260 = vmatmul.f32.gmra.mxu0 %v259
    %v261 = vpop.f32.mrf.mxu0
    %v262 = vadd.f32 %v236, %v261
    %263 = vdwg.mxu0
    %264 = vmatpush.msra.mxu0 0.0
    %265 = vmatpush.msra.mxu0 0.0
    %266 = vmatpush.msra.mxu0 0.0
    %267 = vmatpush.msra.mxu0 0.0
    %268 = vmatpush.msra.mxu0 0.0
    %269 = vmatpush.msra.mxu0 0.0
    %270 = vmatpush.msra.mxu0 0.0
    %271 = vmatpush.msra.mxu0 0.0
    %272 = vmatpush.msra.mxu0 0.0
    %273 = vmatpush.msra.mxu0 0.0
    %274 = vmatpush.msra.mxu0 0.0
    %275 = vmatpush.msra.mxu0 0.0
    %276 = vmatpush.msra.mxu0 0.0
    %277 = vmatpush.msra.mxu0 0.0
    %278 = vmatpush.msra.mxu0 0.0
    %v279 = vand.u32 %v61, 4294901760
    %v280 = vsub.f32 %v61, %v279
    %281 = vmatpush.msra.mxu0 %v280
    %v282 = vand.u32 %v64, 4294901760
    %v283 = vsub.f32 %v64, %v282
    %284 = vmatmul.f32.gmra.mxu0 %v283
    %v285 = vpop.f32.mrf.mxu0
    %v286 = vadd.f32 %v262, %v285
    %287 = vdwg.mxu0
    %288 = vmatpush.msra.mxu0 0.0
    %289 = vmatpush.msra.mxu0 0.0
    %290 = vmatpush.msra.mxu0 0.0
    %291 = vmatpush.msra.mxu0 0.0
    %292 = vmatpush.msra.mxu0 0.0
    %293 = vmatpush.msra.mxu0 0.0
    %294 = vmatpush.msra.mxu0 0.0
    %295 = vmatpush.msra.mxu0 0.0
    %296 = vmatpush.msra.mxu0 0.0
    %297 = vmatpush.msra.mxu0 0.0
    %298 = vmatpush.msra.mxu0 0.0
    %299 = vmatpush.msra.mxu0 0.0
    %300 = vmatpush.msra.mxu0 0.0
    %301 = vmatpush.msra.mxu0 0.0
    %302 = vmatpush.msra.mxu0 0.0
    %v303 = vand.u32 %v61, 4294901760
    %304 = vmatpush.msra.mxu0 %v303
    %v305 = vand.u32 %v64, 4294901760
    %v306 = vsub.f32 %v64, %v305
    %v307 = vand.u32 %v306, 4294901760
    %308 = vmatmul.f32.gmra.mxu0 %v307
    %v309 = vpop.f32.mrf.mxu0
    %v310 = vadd.f32 %v286, %v309
    %311 = vdwg.mxu0
    %312 = vmatpush.msra.mxu0 0.0
    %313 = vmatpush.msra.mxu0 0.0
    %314 = vmatpush.msra.mxu0 0.0
    %315 = vmatpush.msra.mxu0 0.0
    %316 = vmatpush.msra.mxu0 0.0
    %317 = vmatpush.msra.mxu0 0.0
    %318 = vmatpush.msra.mxu0 0.0
    %319 = vmatpush.msra.mxu0 0.0
    %320 = vmatpush.msra.mxu0 0.0
    %321 = vmatpush.msra.mxu0 0.0
    %322 = vmatpush.msra.mxu0 0.0
    %323 = vmatpush.msra.mxu0 0.0
    %324 = vmatpush.msra.mxu0 0.0
    %325 = vmatpush.msra.mxu0 0.0
    %326 = vmatpush.msra.mxu0 0.0
    %v327 = vand.u32 %v61, 4294901760
    %v328 = vsub.f32 %v61, %v327
    %v329 = vand.u32 %v328, 4294901760
    %330 = vmatpush.msra.mxu0 %v329
    %v331 = vand.u32 %v64, 4294901760
    %332 = vmatmul.f32.gmra.mxu0 %v331
    %v333 = vpop.f32.mrf.mxu0
    %v334 = vadd.f32 %v310, %v333
    %335 = vdwg.mxu0
    %336 = vmatpush.msra.mxu0 0.0
    %337 = vmatpush.msra.mxu0 0.0
    %338 = vmatpush.msra.mxu0 0.0
    %339 = vmatpush.msra.mxu0 0.0
    %340 = vmatpush.msra.mxu0 0.0
    %341 = vmatpush.msra.mxu0 0.0
    %342 = vmatpush.msra.mxu0 0.0
    %343 = vmatpush.msra.mxu0 0.0
    %344 = vmatpush.msra.mxu0 0.0
    %345 = vmatpush.msra.mxu0 0.0
    %346 = vmatpush.msra.mxu0 0.0
    %347 = vmatpush.msra.mxu0 0.0
    %348 = vmatpush.msra.mxu0 0.0
    %349 = vmatpush.msra.mxu0 0.0
    %350 = vmatpush.msra.mxu0 0.0
    %v351 = vand.u32 %v61, 4294901760
    %352 = vmatpush.msra.mxu0 %v351
    %v353 = vand.u32 %v64, 4294901760
    %354 = vmatmul.f32.gmra.mxu0 %v353
    %v355 = vpop.f32.mrf.mxu0
    %v356 = vadd.f32 %v334, %v355
    %357 = vdwg.mxu0
    %v358 = vld [vmem:[#allocation7] sm:$0x3]
    %v360 = vperm.slane %v358, 0
    %v361 = vperm.slane %v358, 1
    %v364 = vmul.f32 %v210, %v360
    %v365 = vmul.f32 %v356, %v361
    %v366 = vld [vmem:[%s3] sm:$0x3]
    %v368 = vperm.slane %v366, 0
    %v369 = vperm.slane %v366, 1
    %v372 = vadd.f32 %v364, %v368
    %v373 = vadd.f32 %v365, %v369
    %v376 = vrot.slane %v373, 6
    %vm377 = vcmask 1041408
    %v378 = vsel %vm377, %v372, %v376
    %380 = vst [vmem:[#allocation8] sm:$0xf] %v378
    // Predicated region
    $region30: #{tpu_custom_call.1} parent=1 // pred_check
      _
    $region31: #{tpu_custom_call.1} parent=1 // pred_check_branch
      %382 = sbr.rel (0) target = $region33
    $region32: #{tpu_custom_call.1} parent=1 // pred_region
      %384 = vsyncadd [#allocation4], 0
      %s386 = sshll.u32 [#allocation8], 4
      %s387 = int_to_ptr.vmem [resolvable:$true] %s386
      %s388 = sshll.u32 %s4, 4
      %s389 = int_to_ptr.hbm [resolvable:$true] %s388
      %391 = dma.vmem_to_hbm [thread:$0]  %s387, 64, %s389, [#allocation4]
    $region33: #{tpu_custom_call.1} parent=1 // pred_fallthru
      _
    // Predicated region
    $region34: #{tpu_custom_call.1} parent=1 // pred_check
      _
    $region35: #{tpu_custom_call.1} parent=1 // pred_check_branch
      %393 = sbr.rel (0) target = $region37
    $region36: #{tpu_custom_call.1} parent=1 // pred_region
      %395 = dma.done [#allocation4], 64
    $region37: #{tpu_custom_call.1} parent=1 // pred_fallthru
      _
    %396 = vsyncpa [#allocation3], 1
    %397 = vsyncpa [#allocation6], 1
    %398 = vsyncpa [#allocation4], 1

// kernel: tpu_custom_call.1
$region0: #{tpu_custom_call.1}
  #allocation0 [shape = 'u32[]', space=smem, size = 0x4, offset = 0x4, fixed_abs, tag = 'smem constant byte address 0x4 - core index']
  #allocation1 [shape = 'u32[72,128]{1,0:T(1,128)}', space=vmem, size = 0x9000, scoped, tag = 'internal scratch']
  %s0 = inlined_call_operand.hbm [shape: f32[2,8], index: 0, kind: input, shape index: {}]
  %s1 = inlined_call_operand.hbm [shape: f32[8,256], index: 1, kind: input, shape index: {}]
  %s2 = inlined_call_operand.hbm [shape: f32[1,256], index: 2, kind: input, shape index: {}]
  %s3 = inlined_call_operand.vmem [shape: f32[1,256], index: 3, kind: input, shape index: {}]
  %s4 = inlined_call_operand.hbm [shape: f32[2,256], index: 4, kind: output, shape index: {}]
  %s5 = sld [smem:[#allocation0]]
  $region38: #{tpu_custom_call.1} parent=0
    _
  %s7 = ssub.s32 1, %s5
  %s8 = scalar_select 0, %s7, %s5
  $region1: #{tpu_custom_call.1} parent=0
    #allocation2 [shape = 'u8[1024]{0}', space=vmem, size = 0x400, scoped, tag = 'input window, operand 0, single buffered']
    #allocation3 [shape = 's32[1]{0}', space=sflag, size = 0x4, scoped, tag = 'scoped memory for tpu_custom_call.1']
    #allocation4 [shape = 's32[1]{0}', space=sflag, size = 0x4, scoped, tag = 'scoped memory for tpu_custom_call.1']
    #allocation5 [shape = 'u8[8192]{0}', space=vmem, size = 0x2000, scoped, tag = 'input window, operand 1, single buffered']
    #allocation6 [shape = 's32[1]{0}', space=sflag, size = 0x4, scoped, tag = 'scoped memory for tpu_custom_call.1']
    #allocation7 [shape = 'u8[1024]{0}', space=vmem, size = 0x400, scoped, tag = 'input window, operand 2, single buffered']
    #allocation8 [shape = 'u8[2048]{0}', space=vmem, size = 0x800, scoped, tag = 'output window, operand 0, single buffered']
    %9 = vsyncpa [#allocation3], 0
    %10 = vsyncpa [#allocation6], 0
    %11 = vsyncpa [#allocation4], 0
    // Predicated region
    $region2: #{tpu_custom_call.1} parent=1 // pred_check
      _
    $region3: #{tpu_custom_call.1} parent=1 // pred_check_branch
      %13 = sbr.rel (0) target = $region5
    $region4: #{tpu_custom_call.1} parent=1 // pred_region
      %15 = vsyncadd [#allocation3], 0
      %s17 = sshll.u32 %s0, 4
      %s18 = int_to_ptr.hbm [resolvable:$true] %s17
      %s19 = sshll.u32 [#allocation2], 4
      %s20 = int_to_ptr.vmem [resolvable:$true] %s19
      %22 = dma.hbm_to_vmem [thread:$0]  %s18, 32, %s20, [#allocation3]
    $region5: #{tpu_custom_call.1} parent=1 // pred_fallthru
      _
    // Predicated region
    $region6: #{tpu_custom_call.1} parent=1 // pred_check
      _
    $region7: #{tpu_custom_call.1} parent=1 // pred_check_branch
      %24 = sbr.rel (0) target = $region9
    $region8: #{tpu_custom_call.1} parent=1 // pred_region
      %26 = vsyncadd [#allocation6], 0
      %s28 = sshll.u32 %s1, 4
      %s29 = int_to_ptr.hbm [resolvable:$true] %s28
      %s30 = sshll.u32 [#allocation5], 4
      %s31 = int_to_ptr.vmem [resolvable:$true] %s30
      %33 = dma.hbm_to_vmem [thread:$0]  %s29, 256, %s31, [#allocation6]
    $region9: #{tpu_custom_call.1} parent=1 // pred_fallthru
      _
    // Predicated region
    $region10: #{tpu_custom_call.1} parent=1 // pred_check
      _
    $region11: #{tpu_custom_call.1} parent=1 // pred_check_branch
      %35 = sbr.rel (0) target = $region13
    $region12: #{tpu_custom_call.1} parent=1 // pred_region
      %37 = vsyncadd [#allocation6], 0
      %s39 = sshll.u32 %s2, 4
      %s40 = int_to_ptr.hbm [resolvable:$true] %s39
      %s41 = sshll.u32 [#allocation7], 4
      %s42 = int_to_ptr.vmem [resolvable:$true] %s41
      %44 = dma.hbm_to_vmem [thread:$0]  %s40, 32, %s42, [#allocation6]
    $region13: #{tpu_custom_call.1} parent=1 // pred_fallthru
      _
    // Predicated region
    $region14: #{tpu_custom_call.1} parent=1 // pred_check
      _
    $region15: #{tpu_custom_call.1} parent=1 // pred_check_branch
      %46 = sbr.rel (0) target = $region17
    $region16: #{tpu_custom_call.1} parent=1 // pred_region
      _
    $region17: #{tpu_custom_call.1} parent=1 // pred_fallthru
      _
    // Predicated region
    $region18: #{tpu_custom_call.1} parent=1 // pred_check
      _
    $region19: #{tpu_custom_call.1} parent=1 // pred_check_branch
      %48 = sbr.rel (0) target = $region21
    $region20: #{tpu_custom_call.1} parent=1 // pred_region
      %50 = dma.done [#allocation3], 32
    $region21: #{tpu_custom_call.1} parent=1 // pred_fallthru
      _
    // Predicated region
    $region22: #{tpu_custom_call.1} parent=1 // pred_check
      _
    $region23: #{tpu_custom_call.1} parent=1 // pred_check_branch
      %52 = sbr.rel (0) target = $region25
    $region24: #{tpu_custom_call.1} parent=1 // pred_region
      %54 = dma.done [#allocation6], 256
    $region25: #{tpu_custom_call.1} parent=1 // pred_fallthru
      _
    // Predicated region
    $region26: #{tpu_custom_call.1} parent=1 // pred_check
      _
    $region27: #{tpu_custom_call.1} parent=1 // pred_check_branch
      %56 = sbr.rel (0) target = $region29
    $region28: #{tpu_custom_call.1} parent=1 // pred_region
      %58 = dma.done [#allocation6], 32
    $region29: #{tpu_custom_call.1} parent=1 // pred_fallthru
      _
    %v59 = vld [vmem:[#allocation2] sm:$0x3]
    %v60 = vld [vmem:[#allocation5] sm:$0xff]
    %v61 = vld [vmem:[#allocation5 + $0x8] sm:$0xff]
    %vm62 = vcmask 64512
    %v64 = vsel %vm62, %v59, 0
    %66 = vmatpush.msra.mxu0 0.0
    %67 = vmatpush.msra.mxu0 0.0
    %68 = vmatpush.msra.mxu0 0.0
    %69 = vmatpush.msra.mxu0 0.0
    %70 = vmatpush.msra.mxu0 0.0
    %71 = vmatpush.msra.mxu0 0.0
    %72 = vmatpush.msra.mxu0 0.0
    %73 = vmatpush.msra.mxu0 0.0
    %74 = vmatpush.msra.mxu0 0.0
    %75 = vmatpush.msra.mxu0 0.0
    %76 = vmatpush.msra.mxu0 0.0
    %77 = vmatpush.msra.mxu0 0.0
    %78 = vmatpush.msra.mxu0 0.0
    %79 = vmatpush.msra.mxu0 0.0
    %80 = vmatpush.msra.mxu0 0.0
    %v81 = vand.u32 %v60, 4294901760
    %82 = vmatpush.msra.mxu0 %v81
    %v83 = vand.u32 %v64, 4294901760
    %v84 = vsub.f32 %v64, %v83
    %v85 = vand.u32 %v84, 4294901760
    %v86 = vsub.f32 %v84, %v85
    %v87 = vand.u32 %v86, 4294901760
    %88 = vmatmul.f32.gmra.mxu0 %v87
    %v89 = vpop.f32.mrf.mxu0
    %v90 = vadd.f32 0.0, %v89
    %91 = vdwg.mxu0
    %92 = vmatpush.msra.mxu0 0.0
    %93 = vmatpush.msra.mxu0 0.0
    %94 = vmatpush.msra.mxu0 0.0
    %95 = vmatpush.msra.mxu0 0.0
    %96 = vmatpush.msra.mxu0 0.0
    %97 = vmatpush.msra.mxu0 0.0
    %98 = vmatpush.msra.mxu0 0.0
    %99 = vmatpush.msra.mxu0 0.0
    %100 = vmatpush.msra.mxu0 0.0
    %101 = vmatpush.msra.mxu0 0.0
    %102 = vmatpush.msra.mxu0 0.0
    %103 = vmatpush.msra.mxu0 0.0
    %104 = vmatpush.msra.mxu0 0.0
    %105 = vmatpush.msra.mxu0 0.0
    %106 = vmatpush.msra.mxu0 0.0
    %v107 = vand.u32 %v60, 4294901760
    %v108 = vsub.f32 %v60, %v107
    %v109 = vand.u32 %v108, 4294901760
    %v110 = vsub.f32 %v108, %v109
    %v111 = vand.u32 %v110, 4294901760
    %112 = vmatpush.msra.mxu0 %v111
    %v113 = vand.u32 %v64, 4294901760
    %114 = vmatmul.f32.gmra.mxu0 %v113
    %v115 = vpop.f32.mrf.mxu0
    %v116 = vadd.f32 %v90, %v115
    %117 = vdwg.mxu0
    %118 = vmatpush.msra.mxu0 0.0
    %119 = vmatpush.msra.mxu0 0.0
    %120 = vmatpush.msra.mxu0 0.0
    %121 = vmatpush.msra.mxu0 0.0
    %122 = vmatpush.msra.mxu0 0.0
    %123 = vmatpush.msra.mxu0 0.0
    %124 = vmatpush.msra.mxu0 0.0
    %125 = vmatpush.msra.mxu0 0.0
    %126 = vmatpush.msra.mxu0 0.0
    %127 = vmatpush.msra.mxu0 0.0
    %128 = vmatpush.msra.mxu0 0.0
    %129 = vmatpush.msra.mxu0 0.0
    %130 = vmatpush.msra.mxu0 0.0
    %131 = vmatpush.msra.mxu0 0.0
    %132 = vmatpush.msra.mxu0 0.0
    %v133 = vand.u32 %v60, 4294901760
    %v134 = vsub.f32 %v60, %v133
    %135 = vmatpush.msra.mxu0 %v134
    %v136 = vand.u32 %v64, 4294901760
    %v137 = vsub.f32 %v64, %v136
    %138 = vmatmul.f32.gmra.mxu0 %v137
    %v139 = vpop.f32.mrf.mxu0
    %v140 = vadd.f32 %v116, %v139
    %141 = vdwg.mxu0
    %142 = vmatpush.msra.mxu0 0.0
    %143 = vmatpush.msra.mxu0 0.0
    %144 = vmatpush.msra.mxu0 0.0
    %145 = vmatpush.msra.mxu0 0.0
    %146 = vmatpush.msra.mxu0 0.0
    %147 = vmatpush.msra.mxu0 0.0
    %148 = vmatpush.msra.mxu0 0.0
    %149 = vmatpush.msra.mxu0 0.0
    %150 = vmatpush.msra.mxu0 0.0
    %151 = vmatpush.msra.mxu0 0.0
    %152 = vmatpush.msra.mxu0 0.0
    %153 = vmatpush.msra.mxu0 0.0
    %154 = vmatpush.msra.mxu0 0.0
    %155 = vmatpush.msra.mxu0 0.0
    %156 = vmatpush.msra.mxu0 0.0
    %v157 = vand.u32 %v60, 4294901760
    %158 = vmatpush.msra.mxu0 %v157
    %v159 = vand.u32 %v64, 4294901760
    %v160 = vsub.f32 %v64, %v159
    %v161 = vand.u32 %v160, 4294901760
    %162 = vmatmul.f32.gmra.mxu0 %v161
    %v163 = vpop.f32.mrf.mxu0
    %v164 = vadd.f32 %v140, %v163
    %165 = vdwg.mxu0
    %166 = vmatpush.msra.mxu0 0.0
    %167 = vmatpush.msra.mxu0 0.0
    %168 = vmatpush.msra.mxu0 0.0
    %169 = vmatpush.msra.mxu0 0.0
    %170 = vmatpush.msra.mxu0 0.0
    %171 = vmatpush.msra.mxu0 0.0
    %172 = vmatpush.msra.mxu0 0.0
    %173 = vmatpush.msra.mxu0 0.0
    %174 = vmatpush.msra.mxu0 0.0
    %175 = vmatpush.msra.mxu0 0.0
    %176 = vmatpush.msra.mxu0 0.0
    %177 = vmatpush.msra.mxu0 0.0
    %178 = vmatpush.msra.mxu0 0.0
    %179 = vmatpush.msra.mxu0 0.0
    %180 = vmatpush.msra.mxu0 0.0
    %v181 = vand.u32 %v60, 4294901760
    %v182 = vsub.f32 %v60, %v181
    %v183 = vand.u32 %v182, 4294901760
    %184 = vmatpush.msra.mxu0 %v183
    %v185 = vand.u32 %v64, 4294901760
    %186 = vmatmul.f32.gmra.mxu0 %v185
    %v187 = vpop.f32.mrf.mxu0
    %v188 = vadd.f32 %v164, %v187
    %189 = vdwg.mxu0
    %190 = vmatpush.msra.mxu0 0.0
    %191 = vmatpush.msra.mxu0 0.0
    %192 = vmatpush.msra.mxu0 0.0
    %193 = vmatpush.msra.mxu0 0.0
    %194 = vmatpush.msra.mxu0 0.0
    %195 = vmatpush.msra.mxu0 0.0
    %196 = vmatpush.msra.mxu0 0.0
    %197 = vmatpush.msra.mxu0 0.0
    %198 = vmatpush.msra.mxu0 0.0
    %199 = vmatpush.msra.mxu0 0.0
    %200 = vmatpush.msra.mxu0 0.0
    %201 = vmatpush.msra.mxu0 0.0
    %202 = vmatpush.msra.mxu0 0.0
    %203 = vmatpush.msra.mxu0 0.0
    %204 = vmatpush.msra.mxu0 0.0
    %v205 = vand.u32 %v60, 4294901760
    %206 = vmatpush.msra.mxu0 %v205
    %v207 = vand.u32 %v64, 4294901760
    %208 = vmatmul.f32.gmra.mxu0 %v207
    %v209 = vpop.f32.mrf.mxu0
    %v210 = vadd.f32 %v188, %v209
    %211 = vdwg.mxu0
    %212 = vmatpush.msra.mxu0 0.0
    %213 = vmatpush.msra.mxu0 0.0
    %214 = vmatpush.msra.mxu0 0.0
    %215 = vmatpush.msra.mxu0 0.0
    %216 = vmatpush.msra.mxu0 0.0
    %217 = vmatpush.msra.mxu0 0.0
    %218 = vmatpush.msra.mxu0 0.0
    %219 = vmatpush.msra.mxu0 0.0
    %220 = vmatpush.msra.mxu0 0.0
    %221 = vmatpush.msra.mxu0 0.0
    %222 = vmatpush.msra.mxu0 0.0
    %223 = vmatpush.msra.mxu0 0.0
    %224 = vmatpush.msra.mxu0 0.0
    %225 = vmatpush.msra.mxu0 0.0
    %226 = vmatpush.msra.mxu0 0.0
    %v227 = vand.u32 %v61, 4294901760
    %228 = vmatpush.msra.mxu0 %v227
    %v229 = vand.u32 %v64, 4294901760
    %v230 = vsub.f32 %v64, %v229
    %v231 = vand.u32 %v230, 4294901760
    %v232 = vsub.f32 %v230, %v231
    %v233 = vand.u32 %v232, 4294901760
    %234 = vmatmul.f32.gmra.mxu0 %v233
    %v235 = vpop.f32.mrf.mxu0
    %v236 = vadd.f32 0.0, %v235
    %237 = vdwg.mxu0
    %238 = vmatpush.msra.mxu0 0.0
    %239 = vmatpush.msra.mxu0 0.0
    %240 = vmatpush.msra.mxu0 0.0
    %241 = vmatpush.msra.mxu0 0.0
    %242 = vmatpush.msra.mxu0 0.0
    %243 = vmatpush.msra.mxu0 0.0
    %244 = vmatpush.msra.mxu0 0.0
    %245 = vmatpush.msra.mxu0 0.0
    %246 = vmatpush.msra.mxu0 0.0
    %247 = vmatpush.msra.mxu0 0.0
    %248 = vmatpush.msra.mxu0 0.0
    %249 = vmatpush.msra.mxu0 0.0
    %250 = vmatpush.msra.mxu0 0.0
    %251 = vmatpush.msra.mxu0 0.0
    %252 = vmatpush.msra.mxu0 0.0
    %v253 = vand.u32 %v61, 4294901760
    %v254 = vsub.f32 %v61, %v253
    %v255 = vand.u32 %v254, 4294901760
    %v256 = vsub.f32 %v254, %v255
    %v257 = vand.u32 %v256, 4294901760
    %258 = vmatpush.msra.mxu0 %v257
    %v259 = vand.u32 %v64, 4294901760
    %260 = vmatmul.f32.gmra.mxu0 %v259
    %v261 = vpop.f32.mrf.mxu0
    %v262 = vadd.f32 %v236, %v261
    %263 = vdwg.mxu0
    %264 = vmatpush.msra.mxu0 0.0
    %265 = vmatpush.msra.mxu0 0.0
    %266 = vmatpush.msra.mxu0 0.0
    %267 = vmatpush.msra.mxu0 0.0
    %268 = vmatpush.msra.mxu0 0.0
    %269 = vmatpush.msra.mxu0 0.0
    %270 = vmatpush.msra.mxu0 0.0
    %271 = vmatpush.msra.mxu0 0.0
    %272 = vmatpush.msra.mxu0 0.0
    %273 = vmatpush.msra.mxu0 0.0
    %274 = vmatpush.msra.mxu0 0.0
    %275 = vmatpush.msra.mxu0 0.0
    %276 = vmatpush.msra.mxu0 0.0
    %277 = vmatpush.msra.mxu0 0.0
    %278 = vmatpush.msra.mxu0 0.0
    %v279 = vand.u32 %v61, 4294901760
    %v280 = vsub.f32 %v61, %v279
    %281 = vmatpush.msra.mxu0 %v280
    %v282 = vand.u32 %v64, 4294901760
    %v283 = vsub.f32 %v64, %v282
    %284 = vmatmul.f32.gmra.mxu0 %v283
    %v285 = vpop.f32.mrf.mxu0
    %v286 = vadd.f32 %v262, %v285
    %287 = vdwg.mxu0
    %288 = vmatpush.msra.mxu0 0.0
    %289 = vmatpush.msra.mxu0 0.0
    %290 = vmatpush.msra.mxu0 0.0
    %291 = vmatpush.msra.mxu0 0.0
    %292 = vmatpush.msra.mxu0 0.0
    %293 = vmatpush.msra.mxu0 0.0
    %294 = vmatpush.msra.mxu0 0.0
    %295 = vmatpush.msra.mxu0 0.0
    %296 = vmatpush.msra.mxu0 0.0
    %297 = vmatpush.msra.mxu0 0.0
    %298 = vmatpush.msra.mxu0 0.0
    %299 = vmatpush.msra.mxu0 0.0
    %300 = vmatpush.msra.mxu0 0.0
    %301 = vmatpush.msra.mxu0 0.0
    %302 = vmatpush.msra.mxu0 0.0
    %v303 = vand.u32 %v61, 4294901760
    %304 = vmatpush.msra.mxu0 %v303
    %v305 = vand.u32 %v64, 4294901760
    %v306 = vsub.f32 %v64, %v305
    %v307 = vand.u32 %v306, 4294901760
    %308 = vmatmul.f32.gmra.mxu0 %v307
    %v309 = vpop.f32.mrf.mxu0
    %v310 = vadd.f32 %v286, %v309
    %311 = vdwg.mxu0
    %312 = vmatpush.msra.mxu0 0.0
    %313 = vmatpush.msra.mxu0 0.0
    %314 = vmatpush.msra.mxu0 0.0
    %315 = vmatpush.msra.mxu0 0.0
    %316 = vmatpush.msra.mxu0 0.0
    %317 = vmatpush.msra.mxu0 0.0
    %318 = vmatpush.msra.mxu0 0.0
    %319 = vmatpush.msra.mxu0 0.0
    %320 = vmatpush.msra.mxu0 0.0
    %321 = vmatpush.msra.mxu0 0.0
    %322 = vmatpush.msra.mxu0 0.0
    %323 = vmatpush.msra.mxu0 0.0
    %324 = vmatpush.msra.mxu0 0.0
    %325 = vmatpush.msra.mxu0 0.0
    %326 = vmatpush.msra.mxu0 0.0
    %v327 = vand.u32 %v61, 4294901760
    %v328 = vsub.f32 %v61, %v327
    %v329 = vand.u32 %v328, 4294901760
    %330 = vmatpush.msra.mxu0 %v329
    %v331 = vand.u32 %v64, 4294901760
    %332 = vmatmul.f32.gmra.mxu0 %v331
    %v333 = vpop.f32.mrf.mxu0
    %v334 = vadd.f32 %v310, %v333
    %335 = vdwg.mxu0
    %336 = vmatpush.msra.mxu0 0.0
    %337 = vmatpush.msra.mxu0 0.0
    %338 = vmatpush.msra.mxu0 0.0
    %339 = vmatpush.msra.mxu0 0.0
    %340 = vmatpush.msra.mxu0 0.0
    %341 = vmatpush.msra.mxu0 0.0
    %342 = vmatpush.msra.mxu0 0.0
    %343 = vmatpush.msra.mxu0 0.0
    %344 = vmatpush.msra.mxu0 0.0
    %345 = vmatpush.msra.mxu0 0.0
    %346 = vmatpush.msra.mxu0 0.0
    %347 = vmatpush.msra.mxu0 0.0
    %348 = vmatpush.msra.mxu0 0.0
    %349 = vmatpush.msra.mxu0 0.0
    %350 = vmatpush.msra.mxu0 0.0
    %v351 = vand.u32 %v61, 4294901760
    %352 = vmatpush.msra.mxu0 %v351
    %v353 = vand.u32 %v64, 4294901760
    %354 = vmatmul.f32.gmra.mxu0 %v353
    %v355 = vpop.f32.mrf.mxu0
    %v356 = vadd.f32 %v334, %v355
    %357 = vdwg.mxu0
    %v358 = vld [vmem:[#allocation7] sm:$0x3]
    %v360 = vperm.slane %v358, 0
    %v361 = vperm.slane %v358, 1
    %v364 = vmul.f32 %v210, %v360
    %v365 = vmul.f32 %v356, %v361
    %v366 = vld [vmem:[%s3] sm:$0x3]
    %v368 = vperm.slane %v366, 0
    %v369 = vperm.slane %v366, 1
    %v372 = vadd.f32 %v364, %v368
    %v373 = vadd.f32 %v365, %v369
    %v376 = vrot.slane %v373, 6
    %vm377 = vcmask 1041408
    %v378 = vsel %vm377, %v372, %v376
    %380 = vst [vmem:[#allocation8] sm:$0xf] %v378
    // Predicated region
    $region30: #{tpu_custom_call.1} parent=1 // pred_check
      _
    $region31: #{tpu_custom_call.1} parent=1 // pred_check_branch
      %382 = sbr.rel (0) target = $region33
    $region32: #{tpu_custom_call.1} parent=1 // pred_region
      %384 = vsyncadd [#allocation4], 0
      %s386 = sshll.u32 [#allocation8], 4
      %s387 = int_to_ptr.vmem [resolvable:$true] %s386
      %s388 = sshll.u32 %s4, 4
      %s389 = int_to_ptr.hbm [resolvable:$true] %s388
      %391 = dma.vmem_to_hbm [thread:$0]  %s387, 64, %s389, [#allocation4]
    $region33: #{tpu_custom_call.1} parent=1 // pred_fallthru
      _
    // Predicated region
    $region34: #{tpu_custom_call.1} parent=1 // pred_check
      _
    $region35: #{tpu_custom_call.1} parent=1 // pred_check_branch
      %393 = sbr.rel (0) target = $region37
    $region36: #{tpu_custom_call.1} parent=1 // pred_region
      %395 = dma.done [#allocation4], 64
    $region37: #{tpu_custom_call.1} parent=1 // pred_fallthru
      _
    %396 = vsyncpa [#allocation3], 1
    %397 = vsyncpa [#allocation6], 1
    %398 = vsyncpa [#allocation4], 1

</llo_original>
